<compile_context>
chip_gen: v5e
topology: v5e:2x2
jax: 0.10.0
libtpu: 0.0.40
codegen_flags: <defaults>
</compile_context>

<pallas_src>
import jax
import jax.numpy as jnp
import numpy as np
from jax.experimental import pallas as pl
from jax.experimental.pallas import tpu as pltpu


def _vq_kernel(x_ref, cba_ref, cbt_ref, q_ref, sse_ref, acc_ref, xa_ref):
    ii = pl.program_id(2)
    ni = pl.num_programs(2)

    nk, ck, _ = cba_ref.shape                    # K chunks, chunk size
    c, ts = x_ref.shape
    big = jnp.float32(nk * ck)                   # > every valid code index

    xt_f32 = x_ref[...].astype(jnp.float32)      # (c, ts)

    # Bias-folded distance operand: append a constant ones row to the x slab so
    # a single MXU matmul against [-e | 0.5*||e||^2] emits the distance proxy
    # directly (no (K, ts) VPU subtract).  The scratch is f32 so the sub-row
    # writes are plain masked f32 stores; the cast to the distance dtype happens
    # on the full register afterwards.
    xa_ref[:c, :] = xt_f32
    xa_ref[c:, :] = jnp.ones((1, ts), dtype=jnp.float32)
    xa = xa_ref[...].astype(cba_ref.dtype)       # (c+1, ts)

    # ---- pass 1: running (min, argmin) over K chunks ------------------------
    def argmin_chunk(kc, carry):
        run_min, run_idx = carry
        dist = jnp.dot(cba_ref[kc], xa,
                       preferred_element_type=jnp.float32)             # (ck, ts)
        iota = (jax.lax.broadcasted_iota(jnp.int32, (ck, 1), 0)
                + kc * ck).astype(jnp.float32)                         # (ck, 1)
        cmin = jnp.min(dist, axis=0, keepdims=True)                    # (1, ts)
        cidx = jnp.min(jnp.where(dist == cmin, iota, big),
                       axis=0, keepdims=True)                          # (1, ts)
        better = cmin < run_min        # strict: earlier chunk wins ties (argmin)
        return jnp.minimum(run_min, cmin), jnp.where(better, cidx, run_idx)

    _, idx = jax.lax.fori_loop(
        0, nk, argmin_chunk,
        (jnp.full((1, ts), jnp.inf, jnp.float32),
         jnp.zeros((1, ts), jnp.float32)),
        unroll=nk <= 2)

    # ---- pass 2: one-hot gather of the selected codes, chunk by chunk -------
    def gather_chunk(kc, qt):
        iota = (jax.lax.broadcasted_iota(jnp.int32, (ck, 1), 0)
                + kc * ck).astype(jnp.float32)
        onehot = (iota == idx).astype(cbt_ref.dtype)                   # (ck, ts)
        return qt + jnp.dot(cbt_ref[kc], onehot,
                            preferred_element_type=jnp.float32)

    qt = jax.lax.fori_loop(0, nk, gather_chunk,
                           jnp.zeros((c, ts), jnp.float32), unroll=nk <= 2)
    q_ref[...] = qt.astype(q_ref.dtype)

    # ---- deferred MSE: elementwise accumulate, scalar reduce once per (b, o) -
    diff = qt - xt_f32

    @pl.when(ii == 0)
    def _():
        acc_ref[...] = jnp.zeros_like(acc_ref)

    acc_ref[...] += diff * diff

    @pl.when(ii == ni - 1)
    def _():
        sse_ref[...] = jnp.full(sse_ref.shape, jnp.sum(acc_ref[...]),
                                dtype=sse_ref.dtype)


def _pick_tile(hw, cap):
    """Largest spatial tile that divides hw, is a multiple of 128 and <= cap."""
    if hw % 128 == 0:
        best = 128
        t = 128
        limit = min(cap, hw)
        while t <= limit:
            if hw % t == 0:
                best = t
            t += 128
        return best
    # TODO(synk): non-128-multiple h*w falls back to one full-spatial block;
    # padding hw to a 128 multiple and masking the tail step would be more robust.
    return hw


def vector_quantizer_forward(latent, codebook, *, tile_s=1024, k_chunk=512,
                             bf16_dist=True):
    """latent: (b, c, h, w); codebook: (K, c).

    Returns (quantized (b, c, h, w), codebook_loss, commitment_loss).  Forward
    values of both losses are identical and the straight-through output equals
    the quantized latent.
    """
    b, c, h, w = latent.shape
    k, cdim = codebook.shape
    assert cdim == c
    hw = h * w

    io_bytes = latent.dtype.itemsize
    dist_dtype = jnp.bfloat16 if bf16_dist else jnp.float32
    gather_dtype = jnp.bfloat16 if latent.dtype == jnp.bfloat16 else jnp.float32
    dist_b = jnp.dtype(dist_dtype).itemsize
    gath_b = jnp.dtype(gather_dtype).itemsize

    # --- codebook operands (hoisted; grid-invariant, VMEM resident) ----------
    # K-chunking caps the (K_chunk, tile_s) live intermediates (mandatory for
    # large codebooks on v7x's 64 MiB VMEM).  K is padded to nk*ck; padding
    # rows carry a huge bias so they can never win the argmin.
    ck = min(k, k_chunk)
    nk = -(-k // ck)
    kp = nk * ck
    pad = kp - k

    codebook = codebook.astype(jnp.float32)
    cb_d = codebook.astype(dist_dtype).astype(jnp.float32)     # distance operand
    he2 = 0.5 * jnp.sum(cb_d * cb_d, axis=-1, keepdims=True)   # (K, 1), from cast codebook
    cba = jnp.concatenate([-cb_d, he2], axis=1)                # (K, c+1): dist = cba @ [x; 1]
    cb_g = codebook
    if pad:
        cba = jnp.concatenate(
            [cba,
             jnp.concatenate([jnp.zeros((pad, c), jnp.float32),
                              jnp.full((pad, 1), 1e30, jnp.float32)], axis=1)],
            axis=0)
        cb_g = jnp.concatenate([cb_g, jnp.zeros((pad, c), jnp.float32)], axis=0)
    cba3 = cba.astype(dist_dtype).reshape(nk, ck, c + 1)                            # (nk, ck, c+1)
    cbt3 = jnp.transpose(cb_g.reshape(nk, ck, c), (0, 2, 1)).astype(gather_dtype)   # (nk, c, ck)

    # --- VMEM-budget-aware tiling (generation aware: ~28 MiB on v7x's 64 MiB
    # VMEM, up to ~57 MiB on the 128 MiB v5e/v6e parts) ------------------------
    try:
        vmem_cap = int(pltpu.get_tpu_info().vmem_capacity_bytes)
    except Exception:
        vmem_cap = 128 * 2**20
    budget = min(int(vmem_cap * 0.45), 64 * 2**20)

    cb_bytes = kp * (c + 1) * dist_b + kp * c * gath_b
    per_col = (4 * c * io_bytes      # double-buffered latent + quantized tiles
               + 8 * c               # SSE accumulator scratch + qt accumulator (f32)
               + 8 * (c + 1)         # f32 xa scratch + one live copy
               + 16 * ck             # dist / sel / one-hot chunk temporaries
               + 64)
    ts_cap = max(128, min(int(tile_s), (budget // 2 - cb_bytes) // per_col))
    ts = _pick_tile(hw, ts_cap)
    ns = hw // ts

    # --- megacore: when b alone can't fill both v7x TensorCores, also split the
    # spatial axis into (outer "parallel", inner "arbitrary") ------------------
    no = 1
    if b % 2 != 0 and ns % 2 == 0:
        no = 2
    ni = ns // no

    vmem_need = cb_bytes + per_col * ts + 4 * no * 128 * 4
    vmem_limit = int(min(budget, max(16 * 2**20, 2 * vmem_need)))

    x = latent.reshape(b, c, hw)          # free reshape, stays in NCHW order

    q_r, sse = pl.pallas_call(
        _vq_kernel,
        out_shape=(
            jax.ShapeDtypeStruct((b, c, hw), latent.dtype),
            jax.ShapeDtypeStruct((b * no, 1, 128), jnp.float32),
        ),
        grid=(b, no, ni),
        in_specs=[
            pl.BlockSpec((None, c, ts), lambda bi, oi, ii: (bi, 0, oi * ni + ii)),
            pl.BlockSpec(memory_space=pltpu.MemorySpace.VMEM),   # (nk, ck, c+1) distance codebook
            pl.BlockSpec(memory_space=pltpu.MemorySpace.VMEM),   # (nk, c, ck)   gather codebook
        ],
        out_specs=(
            pl.BlockSpec((None, c, ts), lambda bi, oi, ii: (bi, 0, oi * ni + ii)),
            pl.BlockSpec((None, 1, 128), lambda bi, oi, ii: (bi * no + oi, 0, 0)),
        ),
        scratch_shapes=[
            pltpu.VMEM((c, ts), jnp.float32),       # deferred SSE accumulator
            pltpu.VMEM((c + 1, ts), jnp.float32),   # bias-augmented x slab
        ],
        compiler_params=pltpu.CompilerParams(
            dimension_semantics=("parallel", "parallel", "arbitrary"),
            vmem_limit_bytes=vmem_limit,
        ),
    )(x, cba3, cbt3)

    loss = jnp.sum(sse[:, 0, 0]) / jnp.float32(b * hw * c)
    q = q_r.reshape(b, c, h, w)
    # TODO(synk): straight-through gradient (latent + (q - latent).detach()) and
    # the detach split between codebook/commitment losses are training-time
    # autograd semantics with no forward-value effect; forward returns (q, loss, loss).
    return q, loss, loss


def _reference(latent, codebook):
    b, c, h, w = latent.shape
    xf = jnp.transpose(latent, (0, 2, 3, 1)).reshape(-1, c)
    dist = jnp.sum((xf[:, None, :] - codebook[None, :, :]) ** 2, axis=-1)
    idx = jnp.argmin(dist, axis=-1)
    q = codebook[idx]
    loss = jnp.mean((q - xf) ** 2)
    qn = jnp.transpose(q.reshape(b, h, w, c), (0, 3, 1, 2))
    return qn, loss


def _check(latent, codebook, q, loss, atol_sel):
    b, c, h, w = latent.shape
    xf = np.asarray(jnp.transpose(latent, (0, 2, 3, 1)).reshape(-1, c))
    qf = np.asarray(jnp.transpose(q, (0, 2, 3, 1)).reshape(-1, c))
    cb = np.asarray(codebook)
    d = ((xf[:, None, :] - cb[None, :, :]) ** 2).sum(-1)
    # every output row is (numerically) an actual codebook row
    row_err = np.abs(qf[:, None, :] - cb[None, :, :]).max(-1).min(-1)
    assert float(row_err.max()) < 1e-5, float(row_err.max())
    # the selected code is the nearest (up to dtype near-tie flips)
    chosen = ((qf - xf) ** 2).sum(-1)
    np.testing.assert_allclose(chosen, d.min(-1), rtol=0.0, atol=atol_sel)
    # loss equals the MSE of the codes actually chosen
    np.testing.assert_allclose(np.asarray(loss), chosen.mean() / c,
                               rtol=1e-5, atol=1e-6)


if __name__ == "__main__":
    b, c, h, w = 2, 4, 16, 16
    num_embeddings = 8

    key = jax.random.PRNGKey(0)
    k_lat, k_cb = jax.random.split(key)
    latent = jax.random.normal(k_lat, (b, c, h, w), dtype=jnp.float32)
    # kaiming_normal_ on (K, C): fan_in = C, gain = sqrt(2) -> std = sqrt(2 / C)
    codebook = (jax.random.normal(k_cb, (num_embeddings, c), dtype=jnp.float32)
                * jnp.sqrt(2.0 / c))

    q_exp, loss_exp = _reference(latent, codebook)

    # --- exact path (f32 distance matmul) -----------------------------------
    q32, cl32, co32 = vector_quantizer_forward(latent, codebook, bf16_dist=False)
    jax.block_until_ready((q32, cl32, co32))
    _check(latent, codebook, q32, cl32, atol_sel=1e-4)
    np.testing.assert_allclose(np.asarray(cl32), np.asarray(loss_exp),
                               rtol=1e-5, atol=1e-6)
    np.testing.assert_allclose(np.asarray(co32), np.asarray(loss_exp),
                               rtol=1e-5, atol=1e-6)

    # --- fast path (bf16 distance matmul, default): near-tie code flips are
    # legitimate, so check selected codes are valid and (near-)optimal ---------
    q16, cl16, co16 = vector_quantizer_forward(latent, codebook)
    jax.block_until_ready((q16, cl16, co16))
    _check(latent, codebook, q16, cl16, atol_sel=0.25)
    np.testing.assert_allclose(np.asarray(co16), np.asarray(loss_exp),
                               rtol=5e-3, atol=1e-4)

    print("KERNEL_OK")
</pallas_src>

<mosaic_0001>
module attributes {stable_mosaic.version = 11 : i64} {
  func.func @_vq_kernel(%arg0: i32, %arg1: i32, %arg2: i32, %arg3: memref<1x4x256xf32, #tpu.memory_space<vmem>>, %arg4: memref<1x8x5xf32, #tpu.memory_space<vmem>>, %arg5: memref<1x4x8xf32, #tpu.memory_space<vmem>>, %arg6: memref<1x4x256xf32, #tpu.memory_space<vmem>>, %arg7: memref<1x1x128xf32, #tpu.memory_space<vmem>>, %arg8: memref<4x256xf32, #tpu.memory_space<vmem>>, %arg9: memref<5x256xf32, #tpu.memory_space<vmem>>) attributes {dimension_semantics = [#tpu.dimension_semantics<parallel>, #tpu.dimension_semantics<parallel>, #tpu.dimension_semantics<arbitrary>], iteration_bounds = array<i64: 2, 1, 1>, scalar_prefetch = 0 : i64, scratch_operands = 2 : i64, tpu.core_type = #tpu.core_type<tc>, window_params = [{transform_indices = @transform_0, window_bounds = array<i64: 1, 4, 256>}, {pipeline_mode = #tpu.pipeline_mode<synchronous>, transform_indices = @transform_1, window_bounds = array<i64: 1, 8, 5>}, {pipeline_mode = #tpu.pipeline_mode<synchronous>, transform_indices = @transform_2, window_bounds = array<i64: 1, 4, 8>}, {transform_indices = @transform_3, window_bounds = array<i64: 1, 4, 256>}, {transform_indices = @transform_4, window_bounds = array<i64: 1, 1, 128>}]} {
    %c0 = arith.constant 0 : index
    %c0_0 = arith.constant 0 : index
    %c0_1 = arith.constant 0 : index
    %0 = vector.load %arg3[%c0, %c0_0, %c0_1] : memref<1x4x256xf32, #tpu.memory_space<vmem>>, vector<1x4x256xf32>
    %1 = vector.shape_cast %0 : vector<1x4x256xf32> to vector<4x256xf32>
    %c0_2 = arith.constant 0 : index
    %c0_3 = arith.constant 0 : index
    %2 = vector.load %arg9[%c0_2, %c0_3] : memref<5x256xf32, #tpu.memory_space<vmem>>, vector<4x256xf32>
    tpu.vector_store %arg9[%c0_2, %c0_3], %1 {strides = array<i32>} : memref<5x256xf32, #tpu.memory_space<vmem>>, vector<4x256xf32>,
    %cst = arith.constant 1.000000e+00 : f32
    %3 = vector.broadcast %cst : f32 to vector<1x256xf32>
    %c4 = arith.constant 4 : index
    %c0_4 = arith.constant 0 : index
    %4 = vector.load %arg9[%c4, %c0_4] : memref<5x256xf32, #tpu.memory_space<vmem>>, vector<1x256xf32>
    tpu.vector_store %arg9[%c4, %c0_4], %3 {strides = array<i32>} : memref<5x256xf32, #tpu.memory_space<vmem>>, vector<1x256xf32>,
    %c0_5 = arith.constant 0 : index
    %c0_6 = arith.constant 0 : index
    %5 = vector.load %arg9[%c0_5, %c0_6] : memref<5x256xf32, #tpu.memory_space<vmem>>, vector<5x256xf32>
    %cst_7 = arith.constant 0x7F800000 : f32
    %6 = vector.broadcast %cst_7 : f32 to vector<1x256xf32>
    %cst_8 = arith.constant 0.000000e+00 : f32
    %7 = vector.broadcast %cst_8 : f32 to vector<1x256xf32>
    %cst_9 = arith.constant 8.000000e+00 : f32
    %c0_i32 = arith.constant 0 : i32
    %8 = arith.index_cast %c0_i32 : i32 to index
    %c0_10 = arith.constant 0 : index
    %c0_11 = arith.constant 0 : index
    %9 = vector.load %arg4[%8, %c0_10, %c0_11] : memref<1x8x5xf32, #tpu.memory_space<vmem>>, vector<1x8x5xf32>
    %10 = vector.shape_cast %9 : vector<1x8x5xf32> to vector<8x5xf32>
    %cst_12 = arith.constant dense<0.000000e+00> : vector<8x256xf32>
    %11 = tpu.matmul %10, %5, %cst_12 {dimension_numbers = #tpu.dot_dimension_numbers<[1], [0], [0], [1], [0, 0, 1, 1], [], []>} : vector<8x5xf32>, vector<5x256xf32>, vector<8x256xf32> -> vector<8x256xf32>
    %12 = tpu.iota {dimensions = array<i32: 0>} : vector<8x1xi32>
    %c8_i32 = arith.constant 8 : i32
    %13 = arith.muli %c0_i32, %c8_i32 : i32
    %14 = vector.broadcast %13 : i32 to vector<8x1xi32>
    %15 = arith.addi %12, %14 : vector<8x1xi32>
    %16 = arith.sitofp %15 : vector<8x1xi32> to vector<8x1xf32>
    %cst_13 = arith.constant dense<0x7F800000> : vector<256xf32>
    %17 = vector.multi_reduction <minimumf>, %11, %cst_13 [0] : vector<8x256xf32> to vector<256xf32>
    %18 = vector.shape_cast %17 : vector<256xf32> to vector<1x256xf32>
    %19 = vector.broadcast %18 : vector<1x256xf32> to vector<8x256xf32>
    %20 = arith.cmpf oeq, %11, %19 : vector<8x256xf32>
    %21 = vector.shape_cast %16 : vector<8x1xf32> to vector<8x1xf32>
    %22 = vector.broadcast %21 : vector<8x1xf32> to vector<8x256xf32>
    %23 = vector.broadcast %cst_9 : f32 to vector<8x256xf32>
    %24 = arith.select %20, %22, %23 : vector<8x256xi1>, vector<8x256xf32>
    %cst_14 = arith.constant dense<0x7F800000> : vector<256xf32>
    %25 = vector.multi_reduction <minimumf>, %24, %cst_14 [0] : vector<8x256xf32> to vector<256xf32>
    %26 = vector.shape_cast %25 : vector<256xf32> to vector<1x256xf32>
    %27 = arith.cmpf olt, %18, %6 : vector<1x256xf32>
    %28 = arith.minimumf %6, %18 : vector<1x256xf32>
    %29 = arith.select %27, %26, %7 : vector<1x256xi1>, vector<1x256xf32>
    %c1_i32 = arith.constant 1 : i32
    %cst_15 = arith.constant 0.000000e+00 : f32
    %30 = vector.broadcast %cst_15 : f32 to vector<4x256xf32>
    %c0_i32_16 = arith.constant 0 : i32
    %31 = tpu.iota {dimensions = array<i32: 0>} : vector<8x1xi32>
    %c8_i32_17 = arith.constant 8 : i32
    %32 = arith.muli %c0_i32_16, %c8_i32_17 : i32
    %33 = vector.broadcast %32 : i32 to vector<8x1xi32>
    %34 = arith.addi %31, %33 : vector<8x1xi32>
    %35 = arith.sitofp %34 : vector<8x1xi32> to vector<8x1xf32>
    %36 = vector.broadcast %35 : vector<8x1xf32> to vector<8x256xf32>
    %37 = vector.broadcast %29 : vector<1x256xf32> to vector<8x256xf32>
    %38 = arith.cmpf oeq, %36, %37 : vector<8x256xf32>
    %39 = arith.extui %38 : vector<8x256xi1> to vector<8x256xi32>
    %40 = arith.sitofp %39 : vector<8x256xi32> to vector<8x256xf32>
    %41 = arith.index_cast %c0_i32_16 : i32 to index
    %c0_18 = arith.constant 0 : index
    %c0_19 = arith.constant 0 : index
    %42 = vector.load %arg5[%41, %c0_18, %c0_19] : memref<1x4x8xf32, #tpu.memory_space<vmem>>, vector<1x4x8xf32>
    %43 = vector.shape_cast %42 : vector<1x4x8xf32> to vector<4x8xf32>
    %cst_20 = arith.constant dense<0.000000e+00> : vector<4x256xf32>
    %44 = tpu.matmul %43, %40, %cst_20 {dimension_numbers = #tpu.dot_dimension_numbers<[1], [0], [0], [1], [0, 0, 1, 1], [], []>} : vector<4x8xf32>, vector<8x256xf32>, vector<4x256xf32> -> vector<4x256xf32>
    %45 = arith.addf %30, %44 : vector<4x256xf32>
    %c1_i32_21 = arith.constant 1 : i32
    %c0_22 = arith.constant 0 : index
    %c0_23 = arith.constant 0 : index
    %c0_24 = arith.constant 0 : index
    %46 = vector.load %arg6[%c0_22, %c0_23, %c0_24] : memref<1x4x256xf32, #tpu.memory_space<vmem>>, vector<1x4x256xf32>
    %47 = vector.shape_cast %46 : vector<1x4x256xf32> to vector<4x256xf32>
    %48 = vector.shape_cast %45 : vector<4x256xf32> to vector<1x4x256xf32>
    tpu.vector_store %arg6[%c0_22, %c0_23, %c0_24], %48 {strides = array<i32>} : memref<1x4x256xf32, #tpu.memory_space<vmem>>, vector<1x4x256xf32>,
    %49 = arith.subf %45, %1 : vector<4x256xf32>
    %c0_i32_25 = arith.constant 0 : i32
    %50 = arith.cmpi eq, %arg2, %c0_i32_25 : i32
    %51 = arith.extui %50 : i1 to i32
    %c0_i32_26 = arith.constant 0 : i32
    %52 = arith.cmpi ne, %51, %c0_i32_26 : i32
    scf.if %52 {
      %cst_33 = arith.constant 0.000000e+00 : f32
      %60 = vector.broadcast %cst_33 : f32 to vector<4x256xf32>
      %c0_34 = arith.constant 0 : index
      %c0_35 = arith.constant 0 : index
      %61 = vector.load %arg8[%c0_34, %c0_35] : memref<4x256xf32, #tpu.memory_space<vmem>>, vector<4x256xf32>
      tpu.vector_store %arg8[%c0_34, %c0_35], %60 {strides = array<i32>} : memref<4x256xf32, #tpu.memory_space<vmem>>, vector<4x256xf32>,
    } else {
    }
    %c0_27 = arith.constant 0 : index
    %c0_28 = arith.constant 0 : index
    %53 = vector.load %arg8[%c0_27, %c0_28] : memref<4x256xf32, #tpu.memory_space<vmem>>, vector<4x256xf32>
    %54 = arith.mulf %49, %49 : vector<4x256xf32>
    %55 = arith.addf %53, %54 : vector<4x256xf32>
    %c0_29 = arith.constant 0 : index
    %c0_30 = arith.constant 0 : index
    %56 = vector.load %arg8[%c0_29, %c0_30] : memref<4x256xf32, #tpu.memory_space<vmem>>, vector<4x256xf32>
    tpu.vector_store %arg8[%c0_29, %c0_30], %55 {strides = array<i32>} : memref<4x256xf32, #tpu.memory_space<vmem>>, vector<4x256xf32>,
    %c0_i32_31 = arith.constant 0 : i32
    %57 = arith.cmpi eq, %arg2, %c0_i32_31 : i32
    %58 = arith.extui %57 : i1 to i32
    %c0_i32_32 = arith.constant 0 : i32
    %59 = arith.cmpi ne, %58, %c0_i32_32 : i32
    scf.if %59 {
      %c0_33 = arith.constant 0 : index
      %c0_34 = arith.constant 0 : index
      %60 = vector.load %arg8[%c0_33, %c0_34] : memref<4x256xf32, #tpu.memory_space<vmem>>, vector<4x256xf32>
      %61 = vector.shape_cast %60 : vector<4x256xf32> to vector<1x4x256xf32>
      %cst_35 = arith.constant dense<0.000000e+00> : vector<1xf32>
      %62 = vector.multi_reduction <add>, %61, %cst_35 [1, 2] : vector<1x4x256xf32> to vector<1xf32>
      %63 = vector.shape_cast %62 : vector<1xf32> to vector<1x1x1xf32>
      %64 = vector.extract %63[0, 0, 0] : f32 from vector<1x1x1xf32>
      %65 = vector.broadcast %64 : f32 to vector<1x128xf32>
      %c0_36 = arith.constant 0 : index
      %c0_37 = arith.constant 0 : index
      %c0_38 = arith.constant 0 : index
      %66 = vector.load %arg7[%c0_36, %c0_37, %c0_38] : memref<1x1x128xf32, #tpu.memory_space<vmem>>, vector<1x1x128xf32>
      %67 = vector.shape_cast %66 : vector<1x1x128xf32> to vector<1x128xf32>
      %68 = vector.shape_cast %65 : vector<1x128xf32> to vector<1x1x128xf32>
      tpu.vector_store %arg7[%c0_36, %c0_37, %c0_38], %68 {strides = array<i32>} : memref<1x1x128xf32, #tpu.memory_space<vmem>>, vector<1x1x128xf32>,
    } else {
    }
    return
  }
  func.func @transform_0(%arg0: i32, %arg1: i32, %arg2: i32) -> (i32, i32, i32) {
    %c1_i32 = arith.constant 1 : i32
    %0 = arith.muli %arg1, %c1_i32 : i32
    %1 = arith.addi %0, %arg2 : i32
    %c0_i32 = arith.constant 0 : i32
    %c0_i32_0 = arith.constant 0 : i32
    return %arg0, %c0_i32, %1 : i32, i32, i32
  }
  func.func @transform_1(%arg0: i32, %arg1: i32, %arg2: i32) -> (i32, i32, i32) {
    %c0_i32 = arith.constant 0 : i32
    %c0_i32_0 = arith.constant 0 : i32
    %c0_i32_1 = arith.constant 0 : i32
    %c0_i32_2 = arith.constant 0 : i32
    return %c0_i32, %c0_i32_0, %c0_i32_1 : i32, i32, i32
  }
  func.func @transform_2(%arg0: i32, %arg1: i32, %arg2: i32) -> (i32, i32, i32) {
    %c0_i32 = arith.constant 0 : i32
    %c0_i32_0 = arith.constant 0 : i32
    %c0_i32_1 = arith.constant 0 : i32
    %c0_i32_2 = arith.constant 0 : i32
    return %c0_i32, %c0_i32_0, %c0_i32_1 : i32, i32, i32
  }
  func.func @transform_3(%arg0: i32, %arg1: i32, %arg2: i32) -> (i32, i32, i32) {
    %c1_i32 = arith.constant 1 : i32
    %0 = arith.muli %arg1, %c1_i32 : i32
    %1 = arith.addi %0, %arg2 : i32
    %c0_i32 = arith.constant 0 : i32
    %c0_i32_0 = arith.constant 0 : i32
    return %arg0, %c0_i32, %1 : i32, i32, i32
  }
  func.func @transform_4(%arg0: i32, %arg1: i32, %arg2: i32) -> (i32, i32, i32) {
    %c1_i32 = arith.constant 1 : i32
    %0 = arith.muli %arg0, %c1_i32 : i32
    %1 = arith.addi %0, %arg1 : i32
    %c0_i32 = arith.constant 0 : i32
    %c0_i32_0 = arith.constant 0 : i32
    %c0_i32_1 = arith.constant 0 : i32
    return %1, %c0_i32, %c0_i32_0 : i32, i32, i32
  }
}

</mosaic_0001>

<llo_original>
// kernel: tpu_custom_call.1
$region0: #{tpu_custom_call.1}
  #allocation0 [shape = 'u32[]', space=smem, size = 0x4, offset = 0x4, fixed_abs, tag = 'smem constant byte address 0x4 - core index']
  #allocation1 [shape = 'u32[72,128]{1,0:T(1,128)}', space=vmem, size = 0x9000, scoped, tag = 'internal scratch']
  #allocation2 [shape = 'f32[4,256]{1,0:T(4,128)}', space=vmem, size = 0x1000, scoped, tag = 'scratch operand']
  #allocation3 [shape = 'f32[5,256]{1,0:T(8,128)}', space=vmem, size = 0x2000, scoped, tag = 'scratch operand']
  %s0 = inlined_call_operand.hbm [shape: f32[2,4,256], index: 0, kind: input, shape index: {}]
  %s1 = inlined_call_operand.vmem [shape: f32[1,8,5], index: 1, kind: input, shape index: {}]
  %s2 = inlined_call_operand.vmem [shape: f32[1,4,8], index: 2, kind: input, shape index: {}]
  %s3 = inlined_call_operand.hbm [shape: f32[2,4,256], index: 3, kind: output, shape index: {0}]
  %s4 = inlined_call_operand.hbm [shape: f32[2,1,128], index: 4, kind: output, shape index: {1}]
  %5 = xla_tuple %s3, %s4
  %s6 = sld [smem:[#allocation0]]
  $region65: #{tpu_custom_call.1} parent=0
    _
  %s8 = ssub.s32 1, %s6
  %s9 = scalar_select 0, %s8, %s6
  $region1: #{tpu_custom_call.1} parent=0
    #allocation4 [shape = 'u8[8192]{0}', space=vmem, size = 0x2000, scoped, tag = 'input window, operand 0']
    #allocation5 [shape = 's32[2]{0}', space=sflag, size = 0x8, scoped, tag = 'scoped memory for tpu_custom_call.1']
    #allocation6 [shape = 's32[2]{0}', space=sflag, size = 0x8, scoped, tag = 'scoped memory for tpu_custom_call.1']
    #allocation7 [shape = 'u8[8192]{0}', space=vmem, size = 0x2000, scoped, tag = 'output window, operand 0']
    #allocation8 [shape = 'u8[1024]{0}', space=vmem, size = 0x400, scoped, tag = 'output window, operand 1']
    #allocation9 [shape = 's32[2]{0}', space=sflag, size = 0x8, scoped, tag = 'scoped memory for tpu_custom_call.1']
    %10 = vsyncpa [#allocation5], 0
    %s11 = scalar_lea.sflag [#allocation5], 1
    %12 = vsyncpa %s11, 0
    %13 = vsyncpa [#allocation6], 0
    %s14 = scalar_lea.sflag [#allocation6], 1
    %15 = vsyncpa %s14, 0
    %16 = vsyncpa [#allocation9], 0
    %s17 = scalar_lea.sflag [#allocation9], 1
    %18 = vsyncpa %s17, 0
    loop: start=0, step=1, limit=4
    $region2: #{tpu_custom_call.1} parent=1 // loop_pre_header
      _
    $region3: #{tpu_custom_call.1} parent=1 // loop_header
      %s20 = sphi 0, %s24
      %p21 = scmp.ge.s32.totalorder %s20, 4
      %s27 = sphi 0, %s46
      %s28 = sphi 0, %s42
      %s29 = sphi 0, %s38
      %s30 = sphi 0, %s27
      %s31 = sphi 0, %s28
      %s32 = sphi 0, %s29
      %s33 = sphi 0, %s30
      %s34 = sphi 0, %s31
      %s35 = sphi 0, %s32
      %s53 = sphi 0, %s55
      %s56 = sphi 0, %s53
      %s57 = sphi 0, %s56
      %s73 = sphi 0, %s57
      %s77 = sphi 0, %s77
      %s79 = sphi 0, %s77
      %s80 = sphi 0, %s79
      %s94 = sphi 0, %s80
      %s98 = sphi 0, %s98
      %s100 = sphi 0, %s98
      %s101 = sphi 0, %s100
      %s115 = sphi 0, %s101
      %s125 = sphi 0, %s127
      %s128 = sphi 0, %s125
      %s129 = sphi 0, %s128
      %s145 = sphi 0, %s129
      %s153 = sphi 0, %s155
      %s156 = sphi 0, %s153
      %s157 = sphi 0, %s156
      %s173 = sphi 0, %s157
    $region4: #{tpu_custom_call.1} parent=1 // loop_header_branch
      %23 = sbr.rel (%p21) target = $region8
    $region5: #{tpu_custom_call.1} parent=1 // loop_body
      %s25 = ssub.s32 %s20, 1
      %s26 = ssub.s32 %s20, 2
      %s36 = sadd.s32 1, %s29
      %p37 = scmp.ge.s32.totalorder %s36, 1
      %s38 = scalar_select %p37, 0, %s36
      %s39 = sadd.s32 1, %s28
      %s40 = scalar_select %p37, %s39, %s28
      %p41 = scmp.ge.s32.totalorder %s40, 1
      %s42 = scalar_select %p41, 0, %s40
      %s43 = sadd.s32 1, %s27
      %s44 = scalar_select %p41, %s43, %s27
      %p45 = scmp.ge.s32.totalorder %s44, 2
      %s46 = scalar_select %p45, 0, %s44
      %s47 = sadd.s32 %s28, %s29
      %s48 = sadd.s32 %s42, %s38
      %s49 = ssub.s32 %s27, %s46
      %s50 = ssub.s32 %s47, %s48
      %s51 = sor.u32 %s49, %s50
      %p52 = scmp.eq.s32.totalorder %s51, 0
      %s54 = sadd.s32 %s53, 1
      %s55 = scalar_select %p52, %s53, %s54
      %p58 = pneg %p52
      %p59 = scmp.eq.s32.totalorder %s20, 1
      %p60 = por %p58, %p59
      %p61 = scmp.ne.s32.totalorder %s53, %s56
      %p62 = scmp.eq.s32.totalorder %s20, 0
      %p63 = por %p61, %p62
      %p64 = scmp.ne.s32.totalorder %s53, %s56
      %p65 = scmp.eq.s32.totalorder %s25, 1
      %p66 = por %p64, %p65
      %p67 = scmp.ne.s32.totalorder %s56, %s57
      %p68 = scmp.eq.s32.totalorder %s25, 0
      %p69 = por %p67, %p68
      %p70 = scmp.ne.s32.totalorder %s56, %s57
      %p71 = scmp.eq.s32.totalorder %s26, 1
      %p72 = por %p70, %p71
      %p74 = scmp.ne.s32.totalorder %s57, %s73
      %p75 = scmp.eq.s32.totalorder %s26, 0
      %p76 = por %p74, %p75
      %s78 = sadd.s32 %s77, 1
      %p81 = scmp.eq.s32.totalorder %s20, 1
      %p82 = scmp.ne.s32.totalorder %s77, %s79
      %p83 = scmp.eq.s32.totalorder %s20, 0
      %p84 = por %p82, %p83
      %p85 = scmp.ne.s32.totalorder %s77, %s79
      %p86 = scmp.eq.s32.totalorder %s25, 1
      %p87 = por %p85, %p86
      %p88 = scmp.ne.s32.totalorder %s79, %s80
      %p89 = scmp.eq.s32.totalorder %s25, 0
      %p90 = por %p88, %p89
      %p91 = scmp.ne.s32.totalorder %s79, %s80
      %p92 = scmp.eq.s32.totalorder %s26, 1
      %p93 = por %p91, %p92
      %p95 = scmp.ne.s32.totalorder %s80, %s94
      %p96 = scmp.eq.s32.totalorder %s26, 0
      %p97 = por %p95, %p96
      %s99 = sadd.s32 %s98, 1
      %p102 = scmp.eq.s32.totalorder %s20, 1
      %p103 = scmp.ne.s32.totalorder %s98, %s100
      %p104 = scmp.eq.s32.totalorder %s20, 0
      %p105 = por %p103, %p104
      %p106 = scmp.ne.s32.totalorder %s98, %s100
      %p107 = scmp.eq.s32.totalorder %s25, 1
      %p108 = por %p106, %p107
      %p109 = scmp.ne.s32.totalorder %s100, %s101
      %p110 = scmp.eq.s32.totalorder %s25, 0
      %p111 = por %p109, %p110
      %p112 = scmp.ne.s32.totalorder %s100, %s101
      %p113 = scmp.eq.s32.totalorder %s26, 1
      %p114 = por %p112, %p113
      %p116 = scmp.ne.s32.totalorder %s101, %s115
      %p117 = scmp.eq.s32.totalorder %s26, 0
      %p118 = por %p116, %p117
      %s119 = sadd.s32 %s28, %s29
      %s120 = sadd.s32 %s42, %s38
      %s121 = ssub.s32 %s27, %s46
      %s122 = ssub.s32 %s119, %s120
      %s123 = sor.u32 %s121, %s122
      %p124 = scmp.eq.s32.totalorder %s123, 0
      %s126 = sadd.s32 %s125, 1
      %s127 = scalar_select %p124, %s125, %s126
      %p130 = pneg %p124
      %p131 = scmp.eq.s32.totalorder %s20, 1
      %p132 = por %p130, %p131
      %p133 = scmp.ne.s32.totalorder %s125, %s128
      %p134 = scmp.eq.s32.totalorder %s20, 0
      %p135 = por %p133, %p134
      %p136 = scmp.ne.s32.totalorder %s125, %s128
      %p137 = scmp.eq.s32.totalorder %s25, 1
      %p138 = por %p136, %p137
      %p139 = scmp.ne.s32.totalorder %s128, %s129
      %p140 = scmp.eq.s32.totalorder %s25, 0
      %p141 = por %p139, %p140
      %p142 = scmp.ne.s32.totalorder %s128, %s129
      %p143 = scmp.eq.s32.totalorder %s26, 1
      %p144 = por %p142, %p143
      %p146 = scmp.ne.s32.totalorder %s129, %s145
      %p147 = scmp.eq.s32.totalorder %s26, 0
      %p148 = por %p146, %p147
      %s149 = sadd.s32 %s27, %s28
      %s150 = sadd.s32 %s46, %s42
      %s151 = ssub.s32 %s149, %s150
      %p152 = scmp.eq.s32.totalorder %s151, 0
      %s154 = sadd.s32 %s153, 1
      %s155 = scalar_select %p152, %s153, %s154
      %p158 = pneg %p152
      %p159 = scmp.eq.s32.totalorder %s20, 1
      %p160 = por %p158, %p159
      %p161 = scmp.ne.s32.totalorder %s153, %s156
      %p162 = scmp.eq.s32.totalorder %s20, 0
      %p163 = por %p161, %p162
      %p164 = scmp.ne.s32.totalorder %s153, %s156
      %p165 = scmp.eq.s32.totalorder %s25, 1
      %p166 = por %p164, %p165
      %p167 = scmp.ne.s32.totalorder %s156, %s157
      %p168 = scmp.eq.s32.totalorder %s25, 0
      %p169 = por %p167, %p168
      %p170 = scmp.ne.s32.totalorder %s156, %s157
      %p171 = scmp.eq.s32.totalorder %s26, 1
      %p172 = por %p170, %p171
      %p174 = scmp.ne.s32.totalorder %s157, %s173
      %p175 = scmp.eq.s32.totalorder %s26, 0
      %p176 = por %p174, %p175
      %p177 = scmp.le.s32.totalorder 1, %s20
      %p178 = scmp.lt.s32.totalorder %s20, 3
      %p179 = pnand %p177, %p178
      %p180 = pneg %p179
      // Predicated region
      $region9: #{tpu_custom_call.1} parent=5 // pred_check
        _
      $region10: #{tpu_custom_call.1} parent=5 // pred_check_branch
        %182 = sbr.rel (%p179) target = $region12
      $region11: #{tpu_custom_call.1} parent=5 // pred_region
        %s183 = ssub.s32 %s20, 1
        // Predicated region
        $region13: #{tpu_custom_call.1} parent=11 // pred_check
          %p184 = pneg %p90
        $region14: #{tpu_custom_call.1} parent=11 // pred_check_branch
          %186 = sbr.rel (%p184) target = $region16
        $region15: #{tpu_custom_call.1} parent=11 // pred_region
          _
        $region16: #{tpu_custom_call.1} parent=11 // pred_fallthru
          _
        // Predicated region
        $region17: #{tpu_custom_call.1} parent=11 // pred_check
          %p187 = pneg %p111
        $region18: #{tpu_custom_call.1} parent=11 // pred_check_branch
          %189 = sbr.rel (%p187) target = $region20
        $region19: #{tpu_custom_call.1} parent=11 // pred_region
          _
        $region20: #{tpu_custom_call.1} parent=11 // pred_fallthru
          _
      $region12: #{tpu_custom_call.1} parent=5 // pred_fallthru
        _
      %p190 = scmp.lt.s32.totalorder %s20, 2
      // Predicated region
      $region21: #{tpu_custom_call.1} parent=5 // pred_check
        %p191 = pneg %p190
      $region22: #{tpu_custom_call.1} parent=5 // pred_check_branch
        %193 = sbr.rel (%p191) target = $region24
      $region23: #{tpu_custom_call.1} parent=5 // pred_region
        // Predicated region
        $region25: #{tpu_custom_call.1} parent=23 // pred_check
          %p194 = pneg %p63
        $region26: #{tpu_custom_call.1} parent=23 // pred_check_branch
          %196 = sbr.rel (%p194) target = $region28
        $region27: #{tpu_custom_call.1} parent=23 // pred_region
          %s197 = sand.u32 %s53, 1
          %s198 = scalar_lea.sflag [#allocation5], %s197
          %s199 = sand.u32 %s53, 1
          %s200 = smul.addr %s199, 8
          %s201 = scalar_lea.vmem [#allocation4], %s200
          %s202 = sadd.s32 %s28, %s29
          %s203 = smul.u32 2, %s202
          %205 = vsyncadd %s198, 0
          %s206 = smul.addr %s27, 2
          %s207 = sadd.s32 %s203, %s206
          %s208 = smul.addr %s207, 4
          %s209 = scalar_lea.hbm %s0, %s208
          %s211 = sshll.u32 %s209, 4
          %s212 = int_to_ptr.hbm [resolvable:$true] %s211
          %s213 = sshll.u32 %s201, 4
          %s214 = int_to_ptr.vmem [resolvable:$true] %s213
          %216 = dma.hbm_to_vmem [thread:$0]  %s212, 128, %s214, %s198
        $region28: #{tpu_custom_call.1} parent=23 // pred_fallthru
          _
      $region24: #{tpu_custom_call.1} parent=5 // pred_fallthru
        _
      %p217 = scmp.le.s32.totalorder 1, %s20
      %p218 = scmp.lt.s32.totalorder %s20, 3
      %p219 = pnand %p217, %p218
      %p220 = pneg %p219
      // Predicated region
      $region29: #{tpu_custom_call.1} parent=5 // pred_check
        _
      $region30: #{tpu_custom_call.1} parent=5 // pred_check_branch
        %222 = sbr.rel (%p219) target = $region32
      $region31: #{tpu_custom_call.1} parent=5 // pred_region
        %s223 = ssub.s32 %s20, 1
        %s224 = sand.u32 %s56, 1
        %s225 = scalar_lea.sflag [#allocation5], %s224
        %s226 = sand.u32 %s56, 1
        %s227 = smul.addr %s226, 8
        %s228 = scalar_lea.vmem [#allocation4], %s227
        // Predicated region
        $region33: #{tpu_custom_call.1} parent=31 // pred_check
          %p229 = pneg %p69
        $region34: #{tpu_custom_call.1} parent=31 // pred_check_branch
          %231 = sbr.rel (%p229) target = $region36
        $region35: #{tpu_custom_call.1} parent=31 // pred_region
          %233 = dma.done %s225, 128
        $region36: #{tpu_custom_call.1} parent=31 // pred_fallthru
          _
        %s234 = sand.u32 %s56, 1
        %s235 = scalar_lea.sflag [#allocation5], %s234
        %s236 = sand.u32 %s56, 1
        %s237 = smul.addr %s236, 8
        %s238 = scalar_lea.vmem [#allocation4], %s237
        %p239 = pneg %p69
        %p240 = pneg %p66
        %p241 = pneg %p90
        %p242 = pneg %p87
        %p243 = pneg %p111
        %p244 = pneg %p108
        %p245 = pneg %p141
        %p246 = pneg %p138
        %s247 = sand.u32 %s128, 1
        %s248 = scalar_lea.sflag [#allocation6], %s247
        %s249 = sand.u32 %s128, 1
        %s250 = smul.addr %s249, 8
        %s251 = scalar_lea.vmem [#allocation7], %s250
        %p252 = pneg %p169
        %p253 = pneg %p166
        %s254 = sand.u32 %s156, 1
        %s255 = scalar_lea.sflag [#allocation9], %s254
        %s256 = sand.u32 %s156, 1
        %s257 = scalar_lea.vmem [#allocation8], %s256
        %s258 = sadd.s32 %s31, %s32
        %s259 = smul.u32 2, %s258
        %s260 = sadd.s32 %s31, %s32
        %s261 = smul.u32 2, %s260
        %s262 = sadd.s32 %s30, %s31
        %v263 = vld [vmem:[%s228] sm:$0xff]
        %265 = vst [vmem:[#allocation1] ss:$2 sm:$0xff] %v263
        %v266 = vld.sshfl [vmem:[#allocation1] sm:$0xff pattern:$0x75316420]
        %v267 = vld.sshfl [vmem:[#allocation1 + $0x8] sm:$0xff pattern:$0x75316420]
        %270 = vst [vmem:[#allocation3] sm:$0xf] %v266
        %271 = vst [vmem:[#allocation3 + $0x8] sm:$0xf] %v267
        %v272 = vlaneseq
        %vm273 = vcmp.ge.s32.totalorder %v272, 0
        %vm274 = vcmp.lt.s32.totalorder %v272, 256
        %vm275 = vmand %vm273, %vm274
        %s276 = scalar_lea.vmem [#allocation3], 4
        %277 = vst.msk [vmem:[%s276] ss:$8 sm:$0x3] %vm275, 1.0
        %278 = vst.msk [vmem:[%s276] ss:$8 sm:$0x0] %vm275, 1.0
        %v279 = vld [vmem:[#allocation3] sm:$0x1f]
        %v280 = vld [vmem:[#allocation3 + $0x8] sm:$0x1f]
        %v281 = vld [vmem:[%s1] sm:$0xff]
        %vm282 = vcmask 39936
        %v284 = vsel %vm282, %v281, 0
        %vm286 = vcmask 1044480
        %v288 = vsel %vm286, %v279, 0
        %v291 = vsel %vm286, %v280, 0
        %293 = vmatpush.msra.mxu0 0.0
        %294 = vmatpush.msra.mxu0 0.0
        %295 = vmatpush.msra.mxu0 0.0
        %296 = vmatpush.msra.mxu0 0.0
        %297 = vmatpush.msra.mxu0 0.0
        %298 = vmatpush.msra.mxu0 0.0
        %299 = vmatpush.msra.mxu0 0.0
        %300 = vmatpush.msra.mxu0 0.0
        %301 = vmatpush.msra.mxu0 0.0
        %302 = vmatpush.msra.mxu0 0.0
        %303 = vmatpush.msra.mxu0 0.0
        %304 = vmatpush.msra.mxu0 0.0
        %305 = vmatpush.msra.mxu0 0.0
        %306 = vmatpush.msra.mxu0 0.0
        %307 = vmatpush.msra.mxu0 0.0
        %308 = vmatpush.msra.mxu0 %v288
        %309 = vmatmul.f32.gmra.mxu0 %v284
        %v310 = vpop.f32.mrf.mxu0
        %v311 = vadd.f32 0.0, %v310
        %312 = vdwg.mxu0
        %313 = vmatpush.msra.mxu0 0.0
        %314 = vmatpush.msra.mxu0 0.0
        %315 = vmatpush.msra.mxu0 0.0
        %316 = vmatpush.msra.mxu0 0.0
        %317 = vmatpush.msra.mxu0 0.0
        %318 = vmatpush.msra.mxu0 0.0
        %319 = vmatpush.msra.mxu0 0.0
        %320 = vmatpush.msra.mxu0 0.0
        %321 = vmatpush.msra.mxu0 0.0
        %322 = vmatpush.msra.mxu0 0.0
        %323 = vmatpush.msra.mxu0 0.0
        %324 = vmatpush.msra.mxu0 0.0
        %325 = vmatpush.msra.mxu0 0.0
        %326 = vmatpush.msra.mxu0 0.0
        %327 = vmatpush.msra.mxu0 0.0
        %328 = vmatpush.msra.mxu0 %v291
        %329 = vmatmul.f32.gmra.mxu0 %v284
        %v330 = vpop.f32.mrf.mxu0
        %v331 = vadd.f32 0.0, %v330
        %332 = vdwg.mxu0
        %v333 = vlaneseq
        %v334 = vshrl.u32 %v333, 7
        %v335 = vcvt.s32.f32 %v334
        %v336 = vrot.slane %v311, 4
        %v337 = vmin.f32 %v311, %v336
        %v338 = vrot.slane %v337, 2
        %v339 = vmin.f32 %v337, %v338
        %v340 = vrot.slane %v339, 1
        %v341 = vmin.f32 %v339, %v340
        %v342 = vrot.slane %v331, 4
        %v343 = vmin.f32 %v331, %v342
        %v344 = vrot.slane %v343, 2
        %v345 = vmin.f32 %v343, %v344
        %v346 = vrot.slane %v345, 1
        %v347 = vmin.f32 %v345, %v346
        %vm348 = vcmp.eq.f32.partialorder %v311, %v341
        %vm349 = vcmp.eq.f32.partialorder %v331, %v347
        %v350 = vsel %vm348, %v335, 8.0
        %v351 = vsel %vm349, %v335, 8.0
        %v352 = vrot.slane %v350, 4
        %v353 = vmin.f32 %v350, %v352
        %v354 = vrot.slane %v353, 2
        %v355 = vmin.f32 %v353, %v354
        %v356 = vrot.slane %v355, 1
        %v357 = vmin.f32 %v355, %v356
        %v358 = vrot.slane %v351, 4
        %v359 = vmin.f32 %v351, %v358
        %v360 = vrot.slane %v359, 2
        %v361 = vmin.f32 %v359, %v360
        %v362 = vrot.slane %v361, 1
        %v363 = vmin.f32 %v361, %v362
        %vm364 = vcmp.lt.f32.partialorder %v341, inf
        %vm365 = vcmp.lt.f32.partialorder %v347, inf
        %v366 = vsel %vm364, %v357, 0.0
        %v367 = vsel %vm365, %v363, 0.0
        %vm368 = vcmp.eq.f32.partialorder %v335, %v366
        %vm369 = vcmp.eq.f32.partialorder %v335, %v367
        %v370 = vsel %vm368, 1, 0
        %v371 = vsel %vm369, 1, 0
        %v372 = vcvt.s32.f32 %v370
        %v373 = vcvt.s32.f32 %v371
        %v374 = vld [vmem:[%s2] sm:$0xf]
        %vm375 = vcmask 64512
        %v377 = vsel %vm375, %v374, 0
        %379 = vmatpush.msra.mxu0 0.0
        %380 = vmatpush.msra.mxu0 0.0
        %381 = vmatpush.msra.mxu0 0.0
        %382 = vmatpush.msra.mxu0 0.0
        %383 = vmatpush.msra.mxu0 0.0
        %384 = vmatpush.msra.mxu0 0.0
        %385 = vmatpush.msra.mxu0 0.0
        %386 = vmatpush.msra.mxu0 0.0
        %387 = vmatpush.msra.mxu0 0.0
        %388 = vmatpush.msra.mxu0 0.0
        %389 = vmatpush.msra.mxu0 0.0
        %390 = vmatpush.msra.mxu0 0.0
        %391 = vmatpush.msra.mxu0 0.0
        %392 = vmatpush.msra.mxu0 0.0
        %393 = vmatpush.msra.mxu0 0.0
        %394 = vmatpush.msra.mxu0 %v372
        %395 = vmatmul.f32.gmra.mxu0 %v377
        %v396 = vpop.f32.mrf.mxu0
        %v397 = vadd.f32 0.0, %v396
        %398 = vdwg.mxu0
        %399 = vmatpush.msra.mxu0 0.0
        %400 = vmatpush.msra.mxu0 0.0
        %401 = vmatpush.msra.mxu0 0.0
        %402 = vmatpush.msra.mxu0 0.0
        %403 = vmatpush.msra.mxu0 0.0
        %404 = vmatpush.msra.mxu0 0.0
        %405 = vmatpush.msra.mxu0 0.0
        %406 = vmatpush.msra.mxu0 0.0
        %407 = vmatpush.msra.mxu0 0.0
        %408 = vmatpush.msra.mxu0 0.0
        %409 = vmatpush.msra.mxu0 0.0
        %410 = vmatpush.msra.mxu0 0.0
        %411 = vmatpush.msra.mxu0 0.0
        %412 = vmatpush.msra.mxu0 0.0
        %413 = vmatpush.msra.mxu0 0.0
        %414 = vmatpush.msra.mxu0 %v373
        %415 = vmatmul.f32.gmra.mxu0 %v377
        %v416 = vpop.f32.mrf.mxu0
        %v417 = vadd.f32 0.0, %v416
        %418 = vdwg.mxu0
        %v421 = vrot.slane %v417, 4
        %vm422 = vcmask 1043456
        %v423 = vsel %vm422, %v397, %v421
        %425 = vst [vmem:[%s251] sm:$0xff] %v423
        %426 = vst [vmem:[#allocation1] ss:$2 sm:$0xff] %v263
        %v427 = vld.sshfl [vmem:[#allocation1] sm:$0xff pattern:$0x75316420]
        %v428 = vld.sshfl [vmem:[#allocation1 + $0x8] sm:$0xff pattern:$0x75316420]
        %v431 = vsub.f32 %v397, %v427
        %v432 = vsub.f32 %v417, %v428
        %p433 = scmp.eq.s32.totalorder %s32, 0
        // Predicated region
        $region37: #{tpu_custom_call.1} parent=31 // pred_check
          %p434 = pneg %p433
        $region38: #{tpu_custom_call.1} parent=31 // pred_check_branch
          %436 = sbr.rel (%p434) target = $region40
        $region39: #{tpu_custom_call.1} parent=31 // pred_region
          %437 = vst [vmem:[#allocation2] sm:$0xff] 0.0
        $region40: #{tpu_custom_call.1} parent=31 // pred_fallthru
          _
        %v438 = vld [vmem:[#allocation2] sm:$0xff]
        %v439 = vmul.f32 %v431, %v431
        %v440 = vmul.f32 %v432, %v432
        %v443 = vrot.slane %v440, 4
        %v444 = vsel %vm422, %v439, %v443
        %v446 = vadd.f32 %v438, %v444
        %447 = vst [vmem:[#allocation2] sm:$0xff] %v446
        // Predicated region
        $region41: #{tpu_custom_call.1} parent=31 // pred_check
          %p448 = pneg %p433
        $region42: #{tpu_custom_call.1} parent=31 // pred_check_branch
          %450 = sbr.rel (%p448) target = $region44
        $region43: #{tpu_custom_call.1} parent=31 // pred_region
          %v451 = vld [vmem:[#allocation2] sm:$0xff]
          %453 = vst [vmem:[#allocation1] ss:$2 sm:$0xff] %v451
          %v454 = vld.sshfl [vmem:[#allocation1] sm:$0xff pattern:$0x75316420]
          %v455 = vld.sshfl [vmem:[#allocation1 + $0x8] sm:$0xff pattern:$0x75316420]
          %v458 = vsel %vm422, %v454, 0.0
          %v459 = vsel %vm422, %v455, 0.0
          %v460 = vadd.f32 %v458, %v459
          %461 = vadd.xlane.f32.xlu0 %v460
          %v462 = vpop.xlane.xlu0 %461
          %v463 = vrot.slane %v462, 4
          %v464 = vadd.f32 %v462, %v463
          %v465 = vrot.slane %v464, 2
          %v466 = vadd.f32 %v464, %v465
          %v467 = vrot.slane %v466, 1
          %v468 = vadd.f32 %v466, %v467
          %s469 = vtos %v468
          %v470 = vstv %s469
          %471 = vst [vmem:[%s257] sm:$0x1] %v470
        $region44: #{tpu_custom_call.1} parent=31 // pred_fallthru
          _
        %s472 = sand.u32 %s128, 1
        %s473 = scalar_lea.sflag [#allocation6], %s472
        %s474 = sand.u32 %s128, 1
        %s475 = smul.addr %s474, 8
        %s476 = scalar_lea.vmem [#allocation7], %s475
        %s477 = sand.u32 %s156, 1
        %s478 = scalar_lea.sflag [#allocation9], %s477
        %s479 = sand.u32 %s156, 1
        %s480 = scalar_lea.vmem [#allocation8], %s479
        // Predicated region
        $region45: #{tpu_custom_call.1} parent=31 // pred_check
          %p481 = pneg %p138
        $region46: #{tpu_custom_call.1} parent=31 // pred_check_branch
          %483 = sbr.rel (%p481) target = $region48
        $region47: #{tpu_custom_call.1} parent=31 // pred_region
          %s484 = sadd.s32 %s31, %s32
          %s485 = smul.u32 2, %s484
          %487 = vsyncadd %s473, 0
          %s488 = smul.addr %s30, 2
          %s489 = sadd.s32 %s485, %s488
          %s490 = smul.addr %s489, 4
          %s491 = scalar_lea.hbm %s3, %s490
          %s493 = sshll.u32 %s476, 4
          %s494 = int_to_ptr.vmem [resolvable:$true] %s493
          %s495 = sshll.u32 %s491, 4
          %s496 = int_to_ptr.hbm [resolvable:$true] %s495
          %498 = dma.vmem_to_hbm [thread:$0]  %s494, 128, %s496, %s473
        $region48: #{tpu_custom_call.1} parent=31 // pred_fallthru
          _
        // Predicated region
        $region49: #{tpu_custom_call.1} parent=31 // pred_check
          %p499 = pneg %p166
        $region50: #{tpu_custom_call.1} parent=31 // pred_check_branch
          %501 = sbr.rel (%p499) target = $region52
        $region51: #{tpu_custom_call.1} parent=31 // pred_region
          %s502 = sadd.s32 %s30, %s31
          %504 = vsyncadd %s478, 0
          %s505 = scalar_lea.hbm %s4, %s502
          %s507 = sshll.u32 %s480, 4
          %s508 = int_to_ptr.vmem [resolvable:$true] %s507
          %s509 = sshll.u32 %s505, 4
          %s510 = int_to_ptr.hbm [resolvable:$true] %s509
          %512 = dma.vmem_to_hbm [thread:$0]  %s508, 16, %s510, %s478
        $region52: #{tpu_custom_call.1} parent=31 // pred_fallthru
          _
      $region32: #{tpu_custom_call.1} parent=5 // pred_fallthru
        _
      %p513 = scmp.le.s32.totalorder 2, %s20
      // Predicated region
      $region53: #{tpu_custom_call.1} parent=5 // pred_check
        %p514 = pneg %p513
      $region54: #{tpu_custom_call.1} parent=5 // pred_check_branch
        %516 = sbr.rel (%p514) target = $region56
      $region55: #{tpu_custom_call.1} parent=5 // pred_region
        %s517 = ssub.s32 %s20, 2
        // Predicated region
        $region57: #{tpu_custom_call.1} parent=55 // pred_check
          %p518 = pneg %p144
        $region58: #{tpu_custom_call.1} parent=55 // pred_check_branch
          %520 = sbr.rel (%p518) target = $region60
        $region59: #{tpu_custom_call.1} parent=55 // pred_region
          %s521 = sand.u32 %s129, 1
          %s522 = scalar_lea.sflag [#allocation6], %s521
          %s523 = sand.u32 %s129, 1
          %s524 = smul.addr %s523, 8
          %s525 = scalar_lea.vmem [#allocation7], %s524
          %527 = dma.done %s522, 128
        $region60: #{tpu_custom_call.1} parent=55 // pred_fallthru
          _
        // Predicated region
        $region61: #{tpu_custom_call.1} parent=55 // pred_check
          %p528 = pneg %p172
        $region62: #{tpu_custom_call.1} parent=55 // pred_check_branch
          %530 = sbr.rel (%p528) target = $region64
        $region63: #{tpu_custom_call.1} parent=55 // pred_region
          %s531 = sand.u32 %s157, 1
          %s532 = scalar_lea.sflag [#allocation9], %s531
          %s533 = sand.u32 %s157, 1
          %s534 = scalar_lea.vmem [#allocation8], %s533
          %536 = dma.done %s532, 16
        $region64: #{tpu_custom_call.1} parent=55 // pred_fallthru
          _
      $region56: #{tpu_custom_call.1} parent=5 // pred_fallthru
        _
    $region6: #{tpu_custom_call.1} parent=1 // loop_footer
      %s24 = sadd.s32 1, %s20
    $region7: #{tpu_custom_call.1} parent=1 // loop_footer_branch
      %19 = sbr.rel target = $region3
    $region8: #{tpu_custom_call.1} parent=1 // loop_exit
      _
    %537 = vsyncpa [#allocation5], 1
    %s538 = scalar_lea.sflag [#allocation5], 1
    %539 = vsyncpa %s538, 1
    %540 = vsyncpa [#allocation6], 1
    %s541 = scalar_lea.sflag [#allocation6], 1
    %542 = vsyncpa %s541, 1
    %543 = vsyncpa [#allocation9], 1
    %s544 = scalar_lea.sflag [#allocation9], 1
    %545 = vsyncpa %s544, 1

</llo_original>
